<compile_context>
chip_gen: v6e
topology: v6e:2x2x1
jax: 0.10.0
libtpu: 0.0.40
codegen_flags: <defaults>
</compile_context>

<pallas_src>
import jax
import jax.numpy as jnp
from jax import lax
from jax.experimental import pallas as pl
from jax.experimental.pallas import tpu as pltpu


_LANES = 128          # lane width of a vreg
_STRIP = 8            # f32 sublanes per vreg -> strip height
_MAX_BLOCK_ROWS = 64  # 64 rows x 128 lanes = 8192 points per grid step


def _dgp_kernel(d1_ref, d2_ref, nrm_ref, sc_ref):
    """Differential-geometry math on one (block_rows x 128)-point tile.

    d1_ref : (1, 6, R, 128)  channels = [xu_x, xu_y, xu_z, xv_x, xv_y, xv_z]
    d2_ref : (1, 9, R, 128)  channels = [xuu_xyz, xuv_xyz, xvv_xyz]
    nrm_ref: (1, 3, R, 128)  unit normals
    sc_ref : (1, 5, R, 128)  channels = [cmean, cgauss, gE, gF, gG]
    """
    n_strips = d1_ref.shape[2] // _STRIP

    # Strip loop bounds the ~30 live f32 intermediates to ~1 vreg each while
    # keeping the DMA block large enough to amortise per-grid-step overhead.
    @pl.loop(0, n_strips)
    def _(s):
        r0 = pl.multiple_of(s * _STRIP, _STRIP)
        rows = pl.ds(r0, _STRIP)

        xu_x = d1_ref[0, 0, rows, :]
        xu_y = d1_ref[0, 1, rows, :]
        xu_z = d1_ref[0, 2, rows, :]
        xv_x = d1_ref[0, 3, rows, :]
        xv_y = d1_ref[0, 4, rows, :]
        xv_z = d1_ref[0, 5, rows, :]

        # normals = normalize(cross(xu, xv)); F.normalize eps=1e-12 on the norm
        # == clamp of 1e-24 on the squared norm.
        n_x = xu_y * xv_z - xu_z * xv_y
        n_y = xu_z * xv_x - xu_x * xv_z
        n_z = xu_x * xv_y - xu_y * xv_x
        nsq = jnp.maximum(n_x * n_x + n_y * n_y + n_z * n_z, 1e-24)
        inv_n = lax.rsqrt(nsq)                                   # EUP
        inv_n = inv_n * (1.5 - 0.5 * nsq * inv_n * inv_n)        # 1 Newton step
        n_x = n_x * inv_n
        n_y = n_y * inv_n
        n_z = n_z * inv_n

        # first fundamental form g = J^T J = [[E, F], [F, G]]
        gE = xu_x * xu_x + xu_y * xu_y + xu_z * xu_z
        gF = xu_x * xv_x + xu_y * xv_y + xu_z * xv_z
        gG = xv_x * xv_x + xv_y * xv_y + xv_z * xv_z
        detg = gE * gG - gF * gF
        rcp = pl.reciprocal(detg, approx=True)                   # EUP
        inv_detg = rcp * (2.0 - detg * rcp)                      # 1 Newton step

        xuu_x = d2_ref[0, 0, rows, :]
        xuu_y = d2_ref[0, 1, rows, :]
        xuu_z = d2_ref[0, 2, rows, :]
        xuv_x = d2_ref[0, 3, rows, :]
        xuv_y = d2_ref[0, 4, rows, :]
        xuv_z = d2_ref[0, 5, rows, :]
        xvv_x = d2_ref[0, 6, rows, :]
        xvv_y = d2_ref[0, 7, rows, :]
        xvv_z = d2_ref[0, 8, rows, :]

        # mean curvature: 0.5 * sum(-n / detg * (Xuu*G - 2*Xuv*F + Xvv*E))
        t_x = xuu_x * gG - 2.0 * xuv_x * gF + xvv_x * gE
        t_y = xuu_y * gG - 2.0 * xuv_y * gF + xvv_y * gE
        t_z = xuu_z * gG - 2.0 * xuv_z * gF + xvv_z * gE
        cmean = -0.5 * (n_x * t_x + n_y * t_y + n_z * t_z) * inv_detg

        # gaussian curvature: (L*N - M^2) / (E*G - F^2)
        iiL = xuu_x * n_x + xuu_y * n_y + xuu_z * n_z
        iiM = xuv_x * n_x + xuv_y * n_y + xuv_z * n_z
        iiN = xvv_x * n_x + xvv_y * n_y + xvv_z * n_z
        cgauss = (iiL * iiN - iiM * iiM) * inv_detg

        # Dense, (8,128)-aligned stores -> unmasked vst (no partial-row stores).
        nrm_ref[0, 0, rows, :] = n_x
        nrm_ref[0, 1, rows, :] = n_y
        nrm_ref[0, 2, rows, :] = n_z

        sc_ref[0, 0, rows, :] = cmean
        sc_ref[0, 1, rows, :] = cgauss
        sc_ref[0, 2, rows, :] = gE
        sc_ref[0, 3, rows, :] = gF
        sc_ref[0, 4, rows, :] = gG


def _dgp_pallas(d1, d2, block_rows):
    """d1: (B, 6, R, 128), d2: (B, 9, R, 128) f32 -> normals (B,3,R,128),
    scalars (B,5,R,128) = [cmean, cgauss, gE, gF, gG]."""
    B, _, R, _ = d1.shape
    grid = (B, R // block_rows)
    nrm, sc = pl.pallas_call(
        _dgp_kernel,
        out_shape=(jax.ShapeDtypeStruct((B, 3, R, _LANES), jnp.float32),
                   jax.ShapeDtypeStruct((B, 5, R, _LANES), jnp.float32)),
        grid=grid,
        in_specs=[pl.BlockSpec((1, 6, block_rows, _LANES), lambda b, m: (b, 0, m, 0)),
                  pl.BlockSpec((1, 9, block_rows, _LANES), lambda b, m: (b, 0, m, 0))],
        out_specs=(pl.BlockSpec((1, 3, block_rows, _LANES), lambda b, m: (b, 0, m, 0)),
                   pl.BlockSpec((1, 5, block_rows, _LANES), lambda b, m: (b, 0, m, 0))),
        compiler_params=pltpu.CompilerParams(
            dimension_semantics=("parallel", "parallel")),
    )(d1, d2)
    return nrm, sc


class DiffGeomProps:
    """JAX/Pallas port of DiffGeomProps. Since JAX has no implicit autograd
    graph attached to arrays, the differentiable mapping f: R^2 -> R^3 is
    passed explicitly together with uv; derivatives (the torch `df` autograd
    calls) are taken with jax.jacfwd (glue), the geometry math runs in Pallas.
    """

    def __init__(self, normals=True, curv_mean=True, curv_gauss=True, fff=False):
        self._comp_normals = normals
        self._comp_cmean = curv_mean
        self._comp_cgauss = curv_gauss
        self._comp_fff = fff

    def __call__(self, f, uv):
        ret = {}
        if not (self._comp_normals or self._comp_cmean
                or self._comp_cgauss or self._comp_fff):
            return ret

        B, M, _ = uv.shape

        # Pad the (cheap) uv array so the point count is rows_p * 128 with
        # rows_p a multiple of block_rows (itself a multiple of 8).  Edge-mode
        # padding keeps all derived quantities finite in the pad region.
        rows = -(-M // _LANES)
        block_rows = min(_MAX_BLOCK_ROWS, -(-rows // _STRIP) * _STRIP)
        rows_p = -(-rows // block_rows) * block_rows
        Mp = rows_p * _LANES
        uv_p = uv if Mp == M else jnp.pad(
            uv, ((0, 0), (0, Mp - M), (0, 0)), mode="edge")

        # --- glue: derivatives of the mapping (torch.autograd.grad equivalent)
        J = jax.vmap(jax.vmap(jax.jacfwd(f)))(uv_p)              # (B, Mp, D, 2)
        D = J.shape[2]
        if D != 3:
            # TODO(synk): 2D->2D mapping (fff-only path) not wired to the kernel.
            raise NotImplementedError("Only the 2D -> 3D mapping is implemented.")
        H = jax.vmap(jax.vmap(jax.jacfwd(jax.jacfwd(f))))(uv_p)  # (B, Mp, 3, 2, 2)

        ret["tangents"] = jnp.swapaxes(J[:, :M], 2, 3)           # (B, M, 2, 3)

        # One transpose each into the kernel's channel-first lane-dense layout.
        d1 = jnp.transpose(J, (0, 3, 2, 1)).reshape(B, 6, rows_p, _LANES)
        d1 = d1.astype(jnp.float32)
        h3 = jnp.concatenate(
            [H[..., 0, 0], H[..., 0, 1], H[..., 1, 1]], axis=2)  # (B, Mp, 9)
        d2 = jnp.transpose(h3, (0, 2, 1)).reshape(B, 9, rows_p, _LANES)
        d2 = d2.astype(jnp.float32)

        # --- hot path: Pallas kernel
        nrm, sc = _dgp_pallas(d1, d2, block_rows)
        nrm = nrm.reshape(B, 3, Mp)[:, :, :M]
        sc = sc.reshape(B, 5, Mp)[:, :, :M]

        if self._comp_normals:
            ret["normals"] = jnp.transpose(nrm, (0, 2, 1))       # (B, M, 3)
        if self._comp_fff:
            ret["fff"] = jnp.transpose(sc[:, 2:5], (0, 2, 1))    # (B, M, 3) = [E,F,G]
        if self._comp_cmean:
            ret["cmean"] = sc[:, 0]                              # (B, M)
        if self._comp_cgauss:
            ret["cgauss"] = sc[:, 1]                             # (B, M)
        return ret


def _reference(f, uv):
    """Pure-JAX reference mirroring the torch math, for verification."""
    J = jax.vmap(jax.vmap(jax.jacfwd(f)))(uv)
    H = jax.vmap(jax.vmap(jax.jacfwd(jax.jacfwd(f))))(uv)
    xu, xv = J[..., 0], J[..., 1]
    n = jnp.cross(xu, xv)
    n = n / jnp.maximum(jnp.linalg.norm(n, axis=-1, keepdims=True), 1e-12)
    gE = jnp.sum(xu * xu, -1)
    gF = jnp.sum(xu * xv, -1)
    gG = jnp.sum(xv * xv, -1)
    detg = gE * gG - gF * gF
    xuu, xuv, xvv = H[..., 0, 0], H[..., 0, 1], H[..., 1, 1]
    cmean = 0.5 * jnp.sum(
        -n / detg[..., None]
        * (xuu * gG[..., None] - 2.0 * xuv * gF[..., None] + xvv * gE[..., None]),
        axis=-1)
    L = jnp.sum(xuu * n, -1)
    Mm = jnp.sum(xuv * n, -1)
    N = jnp.sum(xvv * n, -1)
    cgauss = (L * N - Mm * Mm) / (gE * gG - gF * gF)
    fff = jnp.stack([gE, gF, gG], axis=-1)
    return n, cmean, cgauss, fff


if __name__ == "__main__":
    # Deterministic synthetic problem: f(u, v) = [u, v, 0.5*sin(2u)*cos(2v)]
    # (Monge patch -> nontrivial mean / gaussian curvature).
    def surface(p):
        u, v = p[0], p[1]
        return jnp.stack([u, v, 0.5 * jnp.sin(2.0 * u) * jnp.cos(2.0 * v)])

    B, M = 2, 512
    key = jax.random.PRNGKey(0)
    uv = jax.random.uniform(key, (B, M, 2), dtype=jnp.float32,
                            minval=0.1, maxval=1.0)

    dgp = DiffGeomProps(normals=True, curv_mean=True, curv_gauss=True, fff=True)
    out = dgp(surface, uv)
    jax.block_until_ready(out)

    n_ref, cmean_ref, cgauss_ref, fff_ref = _reference(surface, uv)

    assert out["tangents"].shape == (B, M, 2, 3)
    assert out["normals"].shape == (B, M, 3)
    assert out["cmean"].shape == (B, M)
    assert out["cgauss"].shape == (B, M)
    assert out["fff"].shape == (B, M, 3)

    assert jnp.allclose(out["normals"], n_ref, rtol=1e-4, atol=1e-4)
    assert jnp.allclose(out["cmean"], cmean_ref, rtol=1e-4, atol=1e-4)
    assert jnp.allclose(out["cgauss"], cgauss_ref, rtol=1e-4, atol=1e-4)
    assert jnp.allclose(out["fff"], fff_ref, rtol=1e-4, atol=1e-4)

    print("KERNEL_OK")
</pallas_src>

<mosaic_0001>
module attributes {stable_mosaic.version = 11 : i64} {
  func.func @_dgp_kernel(%arg0: i32, %arg1: i32, %arg2: memref<1x6x8x128xf32, #tpu.memory_space<vmem>>, %arg3: memref<1x9x8x128xf32, #tpu.memory_space<vmem>>, %arg4: memref<1x3x8x128xf32, #tpu.memory_space<vmem>>, %arg5: memref<1x5x8x128xf32, #tpu.memory_space<vmem>>) attributes {dimension_semantics = [#tpu.dimension_semantics<parallel>, #tpu.dimension_semantics<parallel>], iteration_bounds = array<i64: 2, 1>, scalar_prefetch = 0 : i64, scratch_operands = 0 : i64, tpu.core_type = #tpu.core_type<tc>, window_params = [{transform_indices = @transform_0, window_bounds = array<i64: 1, 6, 8, 128>}, {transform_indices = @transform_1, window_bounds = array<i64: 1, 9, 8, 128>}, {transform_indices = @transform_2, window_bounds = array<i64: 1, 3, 8, 128>}, {transform_indices = @transform_3, window_bounds = array<i64: 1, 5, 8, 128>}]} {
    %c0_i32 = arith.constant 0 : i32
    %c1_i32 = arith.constant 1 : i32
    %0 = arith.muli %c0_i32, %c1_i32 : i32
    %c0_i32_0 = arith.constant 0 : i32
    %1 = arith.addi %c0_i32_0, %0 : i32
    %c8_i32 = arith.constant 8 : i32
    %2 = arith.muli %1, %c8_i32 : i32
    %3 = tpu.assume_multiple %2, 8 : i32
    %c0 = arith.constant 0 : index
    %c0_1 = arith.constant 0 : index
    %4 = arith.index_cast %3 : i32 to index
    %c0_2 = arith.constant 0 : index
    %5 = vector.load %arg2[%c0, %c0_1, %4, %c0_2] : memref<1x6x8x128xf32, #tpu.memory_space<vmem>>, vector<1x1x8x128xf32>
    %6 = vector.shape_cast %5 : vector<1x1x8x128xf32> to vector<8x128xf32>
    %c0_3 = arith.constant 0 : index
    %c1 = arith.constant 1 : index
    %7 = arith.index_cast %3 : i32 to index
    %c0_4 = arith.constant 0 : index
    %8 = vector.load %arg2[%c0_3, %c1, %7, %c0_4] : memref<1x6x8x128xf32, #tpu.memory_space<vmem>>, vector<1x1x8x128xf32>
    %9 = vector.shape_cast %8 : vector<1x1x8x128xf32> to vector<8x128xf32>
    %c0_5 = arith.constant 0 : index
    %c2 = arith.constant 2 : index
    %10 = arith.index_cast %3 : i32 to index
    %c0_6 = arith.constant 0 : index
    %11 = vector.load %arg2[%c0_5, %c2, %10, %c0_6] : memref<1x6x8x128xf32, #tpu.memory_space<vmem>>, vector<1x1x8x128xf32>
    %12 = vector.shape_cast %11 : vector<1x1x8x128xf32> to vector<8x128xf32>
    %c0_7 = arith.constant 0 : index
    %c3 = arith.constant 3 : index
    %13 = arith.index_cast %3 : i32 to index
    %c0_8 = arith.constant 0 : index
    %14 = vector.load %arg2[%c0_7, %c3, %13, %c0_8] : memref<1x6x8x128xf32, #tpu.memory_space<vmem>>, vector<1x1x8x128xf32>
    %15 = vector.shape_cast %14 : vector<1x1x8x128xf32> to vector<8x128xf32>
    %c0_9 = arith.constant 0 : index
    %c4 = arith.constant 4 : index
    %16 = arith.index_cast %3 : i32 to index
    %c0_10 = arith.constant 0 : index
    %17 = vector.load %arg2[%c0_9, %c4, %16, %c0_10] : memref<1x6x8x128xf32, #tpu.memory_space<vmem>>, vector<1x1x8x128xf32>
    %18 = vector.shape_cast %17 : vector<1x1x8x128xf32> to vector<8x128xf32>
    %c0_11 = arith.constant 0 : index
    %c5 = arith.constant 5 : index
    %19 = arith.index_cast %3 : i32 to index
    %c0_12 = arith.constant 0 : index
    %20 = vector.load %arg2[%c0_11, %c5, %19, %c0_12] : memref<1x6x8x128xf32, #tpu.memory_space<vmem>>, vector<1x1x8x128xf32>
    %21 = vector.shape_cast %20 : vector<1x1x8x128xf32> to vector<8x128xf32>
    %22 = arith.mulf %9, %21 : vector<8x128xf32>
    %23 = arith.mulf %12, %18 : vector<8x128xf32>
    %24 = arith.subf %22, %23 : vector<8x128xf32>
    %25 = arith.mulf %12, %15 : vector<8x128xf32>
    %26 = arith.mulf %6, %21 : vector<8x128xf32>
    %27 = arith.subf %25, %26 : vector<8x128xf32>
    %28 = arith.mulf %6, %18 : vector<8x128xf32>
    %29 = arith.mulf %9, %15 : vector<8x128xf32>
    %30 = arith.subf %28, %29 : vector<8x128xf32>
    %31 = arith.mulf %24, %24 : vector<8x128xf32>
    %32 = arith.mulf %27, %27 : vector<8x128xf32>
    %33 = arith.addf %31, %32 : vector<8x128xf32>
    %34 = arith.mulf %30, %30 : vector<8x128xf32>
    %35 = arith.addf %33, %34 : vector<8x128xf32>
    %cst = arith.constant 1.000000e-24 : f32
    %36 = vector.broadcast %cst : f32 to vector<8x128xf32>
    %37 = arith.maximumf %35, %36 : vector<8x128xf32>
    %38 = math.rsqrt %37 : vector<8x128xf32>
    %cst_13 = arith.constant 5.000000e-01 : f32
    %39 = vector.broadcast %cst_13 : f32 to vector<8x128xf32>
    %40 = arith.mulf %39, %37 : vector<8x128xf32>
    %41 = arith.mulf %40, %38 : vector<8x128xf32>
    %42 = arith.mulf %41, %38 : vector<8x128xf32>
    %cst_14 = arith.constant 1.500000e+00 : f32
    %43 = vector.broadcast %cst_14 : f32 to vector<8x128xf32>
    %44 = arith.subf %43, %42 : vector<8x128xf32>
    %45 = arith.mulf %38, %44 : vector<8x128xf32>
    %46 = arith.mulf %24, %45 : vector<8x128xf32>
    %47 = arith.mulf %27, %45 : vector<8x128xf32>
    %48 = arith.mulf %30, %45 : vector<8x128xf32>
    %49 = arith.mulf %6, %6 : vector<8x128xf32>
    %50 = arith.mulf %9, %9 : vector<8x128xf32>
    %51 = arith.addf %49, %50 : vector<8x128xf32>
    %52 = arith.mulf %12, %12 : vector<8x128xf32>
    %53 = arith.addf %51, %52 : vector<8x128xf32>
    %54 = arith.mulf %6, %15 : vector<8x128xf32>
    %55 = arith.mulf %9, %18 : vector<8x128xf32>
    %56 = arith.addf %54, %55 : vector<8x128xf32>
    %57 = arith.mulf %12, %21 : vector<8x128xf32>
    %58 = arith.addf %56, %57 : vector<8x128xf32>
    %59 = arith.mulf %15, %15 : vector<8x128xf32>
    %60 = arith.mulf %18, %18 : vector<8x128xf32>
    %61 = arith.addf %59, %60 : vector<8x128xf32>
    %62 = arith.mulf %21, %21 : vector<8x128xf32>
    %63 = arith.addf %61, %62 : vector<8x128xf32>
    %64 = arith.mulf %53, %63 : vector<8x128xf32>
    %65 = arith.mulf %58, %58 : vector<8x128xf32>
    %66 = arith.subf %64, %65 : vector<8x128xf32>
    %67 = tpu.reciprocal %66 {approx = true} : vector<8x128xf32> -> vector<8x128xf32>
    %68 = arith.mulf %66, %67 : vector<8x128xf32>
    %cst_15 = arith.constant 2.000000e+00 : f32
    %69 = vector.broadcast %cst_15 : f32 to vector<8x128xf32>
    %70 = arith.subf %69, %68 : vector<8x128xf32>
    %71 = arith.mulf %67, %70 : vector<8x128xf32>
    %c0_16 = arith.constant 0 : index
    %c0_17 = arith.constant 0 : index
    %72 = arith.index_cast %3 : i32 to index
    %c0_18 = arith.constant 0 : index
    %73 = vector.load %arg3[%c0_16, %c0_17, %72, %c0_18] : memref<1x9x8x128xf32, #tpu.memory_space<vmem>>, vector<1x1x8x128xf32>
    %74 = vector.shape_cast %73 : vector<1x1x8x128xf32> to vector<8x128xf32>
    %c0_19 = arith.constant 0 : index
    %c1_20 = arith.constant 1 : index
    %75 = arith.index_cast %3 : i32 to index
    %c0_21 = arith.constant 0 : index
    %76 = vector.load %arg3[%c0_19, %c1_20, %75, %c0_21] : memref<1x9x8x128xf32, #tpu.memory_space<vmem>>, vector<1x1x8x128xf32>
    %77 = vector.shape_cast %76 : vector<1x1x8x128xf32> to vector<8x128xf32>
    %c0_22 = arith.constant 0 : index
    %c2_23 = arith.constant 2 : index
    %78 = arith.index_cast %3 : i32 to index
    %c0_24 = arith.constant 0 : index
    %79 = vector.load %arg3[%c0_22, %c2_23, %78, %c0_24] : memref<1x9x8x128xf32, #tpu.memory_space<vmem>>, vector<1x1x8x128xf32>
    %80 = vector.shape_cast %79 : vector<1x1x8x128xf32> to vector<8x128xf32>
    %c0_25 = arith.constant 0 : index
    %c3_26 = arith.constant 3 : index
    %81 = arith.index_cast %3 : i32 to index
    %c0_27 = arith.constant 0 : index
    %82 = vector.load %arg3[%c0_25, %c3_26, %81, %c0_27] : memref<1x9x8x128xf32, #tpu.memory_space<vmem>>, vector<1x1x8x128xf32>
    %83 = vector.shape_cast %82 : vector<1x1x8x128xf32> to vector<8x128xf32>
    %c0_28 = arith.constant 0 : index
    %c4_29 = arith.constant 4 : index
    %84 = arith.index_cast %3 : i32 to index
    %c0_30 = arith.constant 0 : index
    %85 = vector.load %arg3[%c0_28, %c4_29, %84, %c0_30] : memref<1x9x8x128xf32, #tpu.memory_space<vmem>>, vector<1x1x8x128xf32>
    %86 = vector.shape_cast %85 : vector<1x1x8x128xf32> to vector<8x128xf32>
    %c0_31 = arith.constant 0 : index
    %c5_32 = arith.constant 5 : index
    %87 = arith.index_cast %3 : i32 to index
    %c0_33 = arith.constant 0 : index
    %88 = vector.load %arg3[%c0_31, %c5_32, %87, %c0_33] : memref<1x9x8x128xf32, #tpu.memory_space<vmem>>, vector<1x1x8x128xf32>
    %89 = vector.shape_cast %88 : vector<1x1x8x128xf32> to vector<8x128xf32>
    %c0_34 = arith.constant 0 : index
    %c6 = arith.constant 6 : index
    %90 = arith.index_cast %3 : i32 to index
    %c0_35 = arith.constant 0 : index
    %91 = vector.load %arg3[%c0_34, %c6, %90, %c0_35] : memref<1x9x8x128xf32, #tpu.memory_space<vmem>>, vector<1x1x8x128xf32>
    %92 = vector.shape_cast %91 : vector<1x1x8x128xf32> to vector<8x128xf32>
    %c0_36 = arith.constant 0 : index
    %c7 = arith.constant 7 : index
    %93 = arith.index_cast %3 : i32 to index
    %c0_37 = arith.constant 0 : index
    %94 = vector.load %arg3[%c0_36, %c7, %93, %c0_37] : memref<1x9x8x128xf32, #tpu.memory_space<vmem>>, vector<1x1x8x128xf32>
    %95 = vector.shape_cast %94 : vector<1x1x8x128xf32> to vector<8x128xf32>
    %c0_38 = arith.constant 0 : index
    %c8 = arith.constant 8 : index
    %96 = arith.index_cast %3 : i32 to index
    %c0_39 = arith.constant 0 : index
    %97 = vector.load %arg3[%c0_38, %c8, %96, %c0_39] : memref<1x9x8x128xf32, #tpu.memory_space<vmem>>, vector<1x1x8x128xf32>
    %98 = vector.shape_cast %97 : vector<1x1x8x128xf32> to vector<8x128xf32>
    %99 = arith.mulf %74, %63 : vector<8x128xf32>
    %cst_40 = arith.constant 2.000000e+00 : f32
    %100 = vector.broadcast %cst_40 : f32 to vector<8x128xf32>
    %101 = arith.mulf %100, %83 : vector<8x128xf32>
    %102 = arith.mulf %101, %58 : vector<8x128xf32>
    %103 = arith.subf %99, %102 : vector<8x128xf32>
    %104 = arith.mulf %92, %53 : vector<8x128xf32>
    %105 = arith.addf %103, %104 : vector<8x128xf32>
    %106 = arith.mulf %77, %63 : vector<8x128xf32>
    %cst_41 = arith.constant 2.000000e+00 : f32
    %107 = vector.broadcast %cst_41 : f32 to vector<8x128xf32>
    %108 = arith.mulf %107, %86 : vector<8x128xf32>
    %109 = arith.mulf %108, %58 : vector<8x128xf32>
    %110 = arith.subf %106, %109 : vector<8x128xf32>
    %111 = arith.mulf %95, %53 : vector<8x128xf32>
    %112 = arith.addf %110, %111 : vector<8x128xf32>
    %113 = arith.mulf %80, %63 : vector<8x128xf32>
    %cst_42 = arith.constant 2.000000e+00 : f32
    %114 = vector.broadcast %cst_42 : f32 to vector<8x128xf32>
    %115 = arith.mulf %114, %89 : vector<8x128xf32>
    %116 = arith.mulf %115, %58 : vector<8x128xf32>
    %117 = arith.subf %113, %116 : vector<8x128xf32>
    %118 = arith.mulf %98, %53 : vector<8x128xf32>
    %119 = arith.addf %117, %118 : vector<8x128xf32>
    %120 = arith.mulf %46, %105 : vector<8x128xf32>
    %121 = arith.mulf %47, %112 : vector<8x128xf32>
    %122 = arith.addf %120, %121 : vector<8x128xf32>
    %123 = arith.mulf %48, %119 : vector<8x128xf32>
    %124 = arith.addf %122, %123 : vector<8x128xf32>
    %cst_43 = arith.constant -5.000000e-01 : f32
    %125 = vector.broadcast %cst_43 : f32 to vector<8x128xf32>
    %126 = arith.mulf %125, %124 : vector<8x128xf32>
    %127 = arith.mulf %126, %71 : vector<8x128xf32>
    %128 = arith.mulf %74, %46 : vector<8x128xf32>
    %129 = arith.mulf %77, %47 : vector<8x128xf32>
    %130 = arith.addf %128, %129 : vector<8x128xf32>
    %131 = arith.mulf %80, %48 : vector<8x128xf32>
    %132 = arith.addf %130, %131 : vector<8x128xf32>
    %133 = arith.mulf %83, %46 : vector<8x128xf32>
    %134 = arith.mulf %86, %47 : vector<8x128xf32>
    %135 = arith.addf %133, %134 : vector<8x128xf32>
    %136 = arith.mulf %89, %48 : vector<8x128xf32>
    %137 = arith.addf %135, %136 : vector<8x128xf32>
    %138 = arith.mulf %92, %46 : vector<8x128xf32>
    %139 = arith.mulf %95, %47 : vector<8x128xf32>
    %140 = arith.addf %138, %139 : vector<8x128xf32>
    %141 = arith.mulf %98, %48 : vector<8x128xf32>
    %142 = arith.addf %140, %141 : vector<8x128xf32>
    %143 = arith.mulf %132, %142 : vector<8x128xf32>
    %144 = arith.mulf %137, %137 : vector<8x128xf32>
    %145 = arith.subf %143, %144 : vector<8x128xf32>
    %146 = arith.mulf %145, %71 : vector<8x128xf32>
    %c0_44 = arith.constant 0 : index
    %c0_45 = arith.constant 0 : index
    %147 = arith.index_cast %3 : i32 to index
    %c0_46 = arith.constant 0 : index
    %148 = vector.load %arg4[%c0_44, %c0_45, %147, %c0_46] : memref<1x3x8x128xf32, #tpu.memory_space<vmem>>, vector<1x1x8x128xf32>
    %149 = vector.shape_cast %148 : vector<1x1x8x128xf32> to vector<8x128xf32>
    %150 = vector.shape_cast %46 : vector<8x128xf32> to vector<1x1x8x128xf32>
    tpu.vector_store %arg4[%c0_44, %c0_45, %147, %c0_46], %150 {strides = array<i32>} : memref<1x3x8x128xf32, #tpu.memory_space<vmem>>, vector<1x1x8x128xf32>,
    %c0_47 = arith.constant 0 : index
    %c1_48 = arith.constant 1 : index
    %151 = arith.index_cast %3 : i32 to index
    %c0_49 = arith.constant 0 : index
    %152 = vector.load %arg4[%c0_47, %c1_48, %151, %c0_49] : memref<1x3x8x128xf32, #tpu.memory_space<vmem>>, vector<1x1x8x128xf32>
    %153 = vector.shape_cast %152 : vector<1x1x8x128xf32> to vector<8x128xf32>
    %154 = vector.shape_cast %47 : vector<8x128xf32> to vector<1x1x8x128xf32>
    tpu.vector_store %arg4[%c0_47, %c1_48, %151, %c0_49], %154 {strides = array<i32>} : memref<1x3x8x128xf32, #tpu.memory_space<vmem>>, vector<1x1x8x128xf32>,
    %c0_50 = arith.constant 0 : index
    %c2_51 = arith.constant 2 : index
    %155 = arith.index_cast %3 : i32 to index
    %c0_52 = arith.constant 0 : index
    %156 = vector.load %arg4[%c0_50, %c2_51, %155, %c0_52] : memref<1x3x8x128xf32, #tpu.memory_space<vmem>>, vector<1x1x8x128xf32>
    %157 = vector.shape_cast %156 : vector<1x1x8x128xf32> to vector<8x128xf32>
    %158 = vector.shape_cast %48 : vector<8x128xf32> to vector<1x1x8x128xf32>
    tpu.vector_store %arg4[%c0_50, %c2_51, %155, %c0_52], %158 {strides = array<i32>} : memref<1x3x8x128xf32, #tpu.memory_space<vmem>>, vector<1x1x8x128xf32>,
    %c0_53 = arith.constant 0 : index
    %c0_54 = arith.constant 0 : index
    %159 = arith.index_cast %3 : i32 to index
    %c0_55 = arith.constant 0 : index
    %160 = vector.load %arg5[%c0_53, %c0_54, %159, %c0_55] : memref<1x5x8x128xf32, #tpu.memory_space<vmem>>, vector<1x1x8x128xf32>
    %161 = vector.shape_cast %160 : vector<1x1x8x128xf32> to vector<8x128xf32>
    %162 = vector.shape_cast %127 : vector<8x128xf32> to vector<1x1x8x128xf32>
    tpu.vector_store %arg5[%c0_53, %c0_54, %159, %c0_55], %162 {strides = array<i32>} : memref<1x5x8x128xf32, #tpu.memory_space<vmem>>, vector<1x1x8x128xf32>,
    %c0_56 = arith.constant 0 : index
    %c1_57 = arith.constant 1 : index
    %163 = arith.index_cast %3 : i32 to index
    %c0_58 = arith.constant 0 : index
    %164 = vector.load %arg5[%c0_56, %c1_57, %163, %c0_58] : memref<1x5x8x128xf32, #tpu.memory_space<vmem>>, vector<1x1x8x128xf32>
    %165 = vector.shape_cast %164 : vector<1x1x8x128xf32> to vector<8x128xf32>
    %166 = vector.shape_cast %146 : vector<8x128xf32> to vector<1x1x8x128xf32>
    tpu.vector_store %arg5[%c0_56, %c1_57, %163, %c0_58], %166 {strides = array<i32>} : memref<1x5x8x128xf32, #tpu.memory_space<vmem>>, vector<1x1x8x128xf32>,
    %c0_59 = arith.constant 0 : index
    %c2_60 = arith.constant 2 : index
    %167 = arith.index_cast %3 : i32 to index
    %c0_61 = arith.constant 0 : index
    %168 = vector.load %arg5[%c0_59, %c2_60, %167, %c0_61] : memref<1x5x8x128xf32, #tpu.memory_space<vmem>>, vector<1x1x8x128xf32>
    %169 = vector.shape_cast %168 : vector<1x1x8x128xf32> to vector<8x128xf32>
    %170 = vector.shape_cast %53 : vector<8x128xf32> to vector<1x1x8x128xf32>
    tpu.vector_store %arg5[%c0_59, %c2_60, %167, %c0_61], %170 {strides = array<i32>} : memref<1x5x8x128xf32, #tpu.memory_space<vmem>>, vector<1x1x8x128xf32>,
    %c0_62 = arith.constant 0 : index
    %c3_63 = arith.constant 3 : index
    %171 = arith.index_cast %3 : i32 to index
    %c0_64 = arith.constant 0 : index
    %172 = vector.load %arg5[%c0_62, %c3_63, %171, %c0_64] : memref<1x5x8x128xf32, #tpu.memory_space<vmem>>, vector<1x1x8x128xf32>
    %173 = vector.shape_cast %172 : vector<1x1x8x128xf32> to vector<8x128xf32>
    %174 = vector.shape_cast %58 : vector<8x128xf32> to vector<1x1x8x128xf32>
    tpu.vector_store %arg5[%c0_62, %c3_63, %171, %c0_64], %174 {strides = array<i32>} : memref<1x5x8x128xf32, #tpu.memory_space<vmem>>, vector<1x1x8x128xf32>,
    %c0_65 = arith.constant 0 : index
    %c4_66 = arith.constant 4 : index
    %175 = arith.index_cast %3 : i32 to index
    %c0_67 = arith.constant 0 : index
    %176 = vector.load %arg5[%c0_65, %c4_66, %175, %c0_67] : memref<1x5x8x128xf32, #tpu.memory_space<vmem>>, vector<1x1x8x128xf32>
    %177 = vector.shape_cast %176 : vector<1x1x8x128xf32> to vector<8x128xf32>
    %178 = vector.shape_cast %63 : vector<8x128xf32> to vector<1x1x8x128xf32>
    tpu.vector_store %arg5[%c0_65, %c4_66, %175, %c0_67], %178 {strides = array<i32>} : memref<1x5x8x128xf32, #tpu.memory_space<vmem>>, vector<1x1x8x128xf32>,
    %c1_i32_68 = arith.constant 1 : i32
    return
  }
  func.func @transform_0(%arg0: i32, %arg1: i32) -> (i32, i32, i32, i32) {
    %c0_i32 = arith.constant 0 : i32
    %c0_i32_0 = arith.constant 0 : i32
    %c0_i32_1 = arith.constant 0 : i32
    return %arg0, %c0_i32, %arg1, %c0_i32_0 : i32, i32, i32, i32
  }
  func.func @transform_1(%arg0: i32, %arg1: i32) -> (i32, i32, i32, i32) {
    %c0_i32 = arith.constant 0 : i32
    %c0_i32_0 = arith.constant 0 : i32
    %c0_i32_1 = arith.constant 0 : i32
    return %arg0, %c0_i32, %arg1, %c0_i32_0 : i32, i32, i32, i32
  }
  func.func @transform_2(%arg0: i32, %arg1: i32) -> (i32, i32, i32, i32) {
    %c0_i32 = arith.constant 0 : i32
    %c0_i32_0 = arith.constant 0 : i32
    %c0_i32_1 = arith.constant 0 : i32
    return %arg0, %c0_i32, %arg1, %c0_i32_0 : i32, i32, i32, i32
  }
  func.func @transform_3(%arg0: i32, %arg1: i32) -> (i32, i32, i32, i32) {
    %c0_i32 = arith.constant 0 : i32
    %c0_i32_0 = arith.constant 0 : i32
    %c0_i32_1 = arith.constant 0 : i32
    return %arg0, %c0_i32, %arg1, %c0_i32_0 : i32, i32, i32, i32
  }
}

</mosaic_0001>

<llo_original>
// kernel: tpu_custom_call.1
$region0: #{tpu_custom_call.1}
  #allocation0 [shape = 'u32[]', space=smem, size = 0x4, offset = 0x4, fixed_abs, tag = 'smem constant byte address 0x4 - core index']
  #allocation1 [shape = 'u32[144,128]{1,0:T(1,128)}', space=vmem, size = 0x12000, scoped, tag = 'internal scratch']
  %s0 = inlined_call_operand.hbm [shape: f32[2,6,8,128], index: 0, kind: input, shape index: {}]
  %s1 = inlined_call_operand.hbm [shape: f32[2,9,8,128], index: 1, kind: input, shape index: {}]
  %s2 = inlined_call_operand.hbm [shape: f32[2,3,8,128], index: 2, kind: output, shape index: {0}]
  %s3 = inlined_call_operand.hbm [shape: f32[2,5,8,128], index: 3, kind: output, shape index: {1}]
  %4 = xla_tuple %s2, %s3
  %s5 = sld [smem:[#allocation0]]
  $region57: #{tpu_custom_call.1} parent=0
    _
  %s7 = ssub.s32 1, %s5
  %s8 = scalar_select 0, %s7, %s5
  $region1: #{tpu_custom_call.1} parent=0
    #allocation2 [shape = 'u8[49152]{0}', space=vmem, size = 0xc000, scoped, tag = 'input window, operand 0']
    #allocation3 [shape = 's32[2]{0}', space=sflag, size = 0x8, scoped, tag = 'scoped memory for tpu_custom_call.1']
    #allocation4 [shape = 's32[2]{0}', space=sflag, size = 0x8, scoped, tag = 'scoped memory for tpu_custom_call.1']
    #allocation5 [shape = 'u8[73728]{0}', space=vmem, size = 0x12000, scoped, tag = 'input window, operand 1']
    #allocation6 [shape = 's32[2]{0}', space=sflag, size = 0x8, scoped, tag = 'scoped memory for tpu_custom_call.1']
    #allocation7 [shape = 'u8[24576]{0}', space=vmem, size = 0x6000, scoped, tag = 'output window, operand 0']
    #allocation8 [shape = 'u8[40960]{0}', space=vmem, size = 0xa000, scoped, tag = 'output window, operand 1']
    #allocation9 [shape = 's32[2]{0}', space=sflag, size = 0x8, scoped, tag = 'scoped memory for tpu_custom_call.1']
    %9 = vsyncpa [#allocation3], 0
    %s10 = scalar_lea.sflag [#allocation3], 1
    %11 = vsyncpa %s10, 0
    %12 = vsyncpa [#allocation6], 0
    %s13 = scalar_lea.sflag [#allocation6], 1
    %14 = vsyncpa %s13, 0
    %15 = vsyncpa [#allocation4], 0
    %s16 = scalar_lea.sflag [#allocation4], 1
    %17 = vsyncpa %s16, 0
    %18 = vsyncpa [#allocation9], 0
    %s19 = scalar_lea.sflag [#allocation9], 1
    %20 = vsyncpa %s19, 0
    loop: start=0, step=1, limit=4
    $region2: #{tpu_custom_call.1} parent=1 // loop_pre_header
      _
    $region3: #{tpu_custom_call.1} parent=1 // loop_header
      %s22 = sphi 0, %s26
      %p23 = scmp.ge.s32.totalorder %s22, 4
      %s29 = sphi 0, %s41
      %s30 = sphi 0, %s37
      %s31 = sphi 0, %s29
      %s32 = sphi 0, %s30
      %s33 = sphi 0, %s31
      %s34 = sphi 0, %s32
      %s46 = sphi 0, %s48
      %s49 = sphi 0, %s46
      %s50 = sphi 0, %s49
      %s66 = sphi 0, %s50
      %s74 = sphi 0, %s76
      %s77 = sphi 0, %s74
      %s78 = sphi 0, %s77
      %s94 = sphi 0, %s78
      %s102 = sphi 0, %s104
      %s105 = sphi 0, %s102
      %s106 = sphi 0, %s105
      %s122 = sphi 0, %s106
      %s130 = sphi 0, %s132
      %s133 = sphi 0, %s130
      %s134 = sphi 0, %s133
      %s150 = sphi 0, %s134
    $region4: #{tpu_custom_call.1} parent=1 // loop_header_branch
      %25 = sbr.rel (%p23) target = $region8
    $region5: #{tpu_custom_call.1} parent=1 // loop_body
      %s27 = ssub.s32 %s22, 1
      %s28 = ssub.s32 %s22, 2
      %s35 = sadd.s32 1, %s30
      %p36 = scmp.ge.s32.totalorder %s35, 1
      %s37 = scalar_select %p36, 0, %s35
      %s38 = sadd.s32 1, %s29
      %s39 = scalar_select %p36, %s38, %s29
      %p40 = scmp.ge.s32.totalorder %s39, 2
      %s41 = scalar_select %p40, 0, %s39
      %s42 = ssub.s32 %s29, %s41
      %s43 = ssub.s32 %s30, %s37
      %s44 = sor.u32 %s42, %s43
      %p45 = scmp.eq.s32.totalorder %s44, 0
      %s47 = sadd.s32 %s46, 1
      %s48 = scalar_select %p45, %s46, %s47
      %p51 = pneg %p45
      %p52 = scmp.eq.s32.totalorder %s22, 1
      %p53 = por %p51, %p52
      %p54 = scmp.ne.s32.totalorder %s46, %s49
      %p55 = scmp.eq.s32.totalorder %s22, 0
      %p56 = por %p54, %p55
      %p57 = scmp.ne.s32.totalorder %s46, %s49
      %p58 = scmp.eq.s32.totalorder %s27, 1
      %p59 = por %p57, %p58
      %p60 = scmp.ne.s32.totalorder %s49, %s50
      %p61 = scmp.eq.s32.totalorder %s27, 0
      %p62 = por %p60, %p61
      %p63 = scmp.ne.s32.totalorder %s49, %s50
      %p64 = scmp.eq.s32.totalorder %s28, 1
      %p65 = por %p63, %p64
      %p67 = scmp.ne.s32.totalorder %s50, %s66
      %p68 = scmp.eq.s32.totalorder %s28, 0
      %p69 = por %p67, %p68
      %s70 = ssub.s32 %s29, %s41
      %s71 = ssub.s32 %s30, %s37
      %s72 = sor.u32 %s70, %s71
      %p73 = scmp.eq.s32.totalorder %s72, 0
      %s75 = sadd.s32 %s74, 1
      %s76 = scalar_select %p73, %s74, %s75
      %p79 = pneg %p73
      %p80 = scmp.eq.s32.totalorder %s22, 1
      %p81 = por %p79, %p80
      %p82 = scmp.ne.s32.totalorder %s74, %s77
      %p83 = scmp.eq.s32.totalorder %s22, 0
      %p84 = por %p82, %p83
      %p85 = scmp.ne.s32.totalorder %s74, %s77
      %p86 = scmp.eq.s32.totalorder %s27, 1
      %p87 = por %p85, %p86
      %p88 = scmp.ne.s32.totalorder %s77, %s78
      %p89 = scmp.eq.s32.totalorder %s27, 0
      %p90 = por %p88, %p89
      %p91 = scmp.ne.s32.totalorder %s77, %s78
      %p92 = scmp.eq.s32.totalorder %s28, 1
      %p93 = por %p91, %p92
      %p95 = scmp.ne.s32.totalorder %s78, %s94
      %p96 = scmp.eq.s32.totalorder %s28, 0
      %p97 = por %p95, %p96
      %s98 = ssub.s32 %s29, %s41
      %s99 = ssub.s32 %s30, %s37
      %s100 = sor.u32 %s98, %s99
      %p101 = scmp.eq.s32.totalorder %s100, 0
      %s103 = sadd.s32 %s102, 1
      %s104 = scalar_select %p101, %s102, %s103
      %p107 = pneg %p101
      %p108 = scmp.eq.s32.totalorder %s22, 1
      %p109 = por %p107, %p108
      %p110 = scmp.ne.s32.totalorder %s102, %s105
      %p111 = scmp.eq.s32.totalorder %s22, 0
      %p112 = por %p110, %p111
      %p113 = scmp.ne.s32.totalorder %s102, %s105
      %p114 = scmp.eq.s32.totalorder %s27, 1
      %p115 = por %p113, %p114
      %p116 = scmp.ne.s32.totalorder %s105, %s106
      %p117 = scmp.eq.s32.totalorder %s27, 0
      %p118 = por %p116, %p117
      %p119 = scmp.ne.s32.totalorder %s105, %s106
      %p120 = scmp.eq.s32.totalorder %s28, 1
      %p121 = por %p119, %p120
      %p123 = scmp.ne.s32.totalorder %s106, %s122
      %p124 = scmp.eq.s32.totalorder %s28, 0
      %p125 = por %p123, %p124
      %s126 = ssub.s32 %s29, %s41
      %s127 = ssub.s32 %s30, %s37
      %s128 = sor.u32 %s126, %s127
      %p129 = scmp.eq.s32.totalorder %s128, 0
      %s131 = sadd.s32 %s130, 1
      %s132 = scalar_select %p129, %s130, %s131
      %p135 = pneg %p129
      %p136 = scmp.eq.s32.totalorder %s22, 1
      %p137 = por %p135, %p136
      %p138 = scmp.ne.s32.totalorder %s130, %s133
      %p139 = scmp.eq.s32.totalorder %s22, 0
      %p140 = por %p138, %p139
      %p141 = scmp.ne.s32.totalorder %s130, %s133
      %p142 = scmp.eq.s32.totalorder %s27, 1
      %p143 = por %p141, %p142
      %p144 = scmp.ne.s32.totalorder %s133, %s134
      %p145 = scmp.eq.s32.totalorder %s27, 0
      %p146 = por %p144, %p145
      %p147 = scmp.ne.s32.totalorder %s133, %s134
      %p148 = scmp.eq.s32.totalorder %s28, 1
      %p149 = por %p147, %p148
      %p151 = scmp.ne.s32.totalorder %s134, %s150
      %p152 = scmp.eq.s32.totalorder %s28, 0
      %p153 = por %p151, %p152
      %p154 = scmp.le.s32.totalorder 1, %s22
      %p155 = scmp.lt.s32.totalorder %s22, 3
      %p156 = pnand %p154, %p155
      %p157 = pneg %p156
      // Predicated region
      $region9: #{tpu_custom_call.1} parent=5 // pred_check
        _
      $region10: #{tpu_custom_call.1} parent=5 // pred_check_branch
        %159 = sbr.rel (%p156) target = $region12
      $region11: #{tpu_custom_call.1} parent=5 // pred_region
        %s160 = ssub.s32 %s22, 1
      $region12: #{tpu_custom_call.1} parent=5 // pred_fallthru
        _
      %p161 = scmp.lt.s32.totalorder %s22, 2
      // Predicated region
      $region13: #{tpu_custom_call.1} parent=5 // pred_check
        %p162 = pneg %p161
      $region14: #{tpu_custom_call.1} parent=5 // pred_check_branch
        %164 = sbr.rel (%p162) target = $region16
      $region15: #{tpu_custom_call.1} parent=5 // pred_region
        // Predicated region
        $region17: #{tpu_custom_call.1} parent=15 // pred_check
          %p165 = pneg %p56
        $region18: #{tpu_custom_call.1} parent=15 // pred_check_branch
          %167 = sbr.rel (%p165) target = $region20
        $region19: #{tpu_custom_call.1} parent=15 // pred_region
          %s168 = sand.u32 %s46, 1
          %s169 = scalar_lea.sflag [#allocation3], %s168
          %s170 = sand.u32 %s46, 1
          %s171 = smul.addr %s170, 48
          %s172 = scalar_lea.vmem [#allocation2], %s171
          %s174 = ssub.s32 768, 768
          %175 = vsyncadd %s169, %s174
          %s176 = smul.addr %s29, 6
          %s177 = sadd.s32 %s30, %s176
          %s178 = smul.addr %s177, 128
          %s179 = scalar_lea.hbm %s0, %s178
          %s180 = sshll.u32 %s172, 4
          %s181 = int_to_ptr.vmem [resolvable:$true] %s180
          %186 = dma.hbm_to_vmem [thread:$0]  %s179, 768, %s181, %s169, 128, 128, 8
        $region20: #{tpu_custom_call.1} parent=15 // pred_fallthru
          _
        // Predicated region
        $region21: #{tpu_custom_call.1} parent=15 // pred_check
          %p187 = pneg %p84
        $region22: #{tpu_custom_call.1} parent=15 // pred_check_branch
          %189 = sbr.rel (%p187) target = $region24
        $region23: #{tpu_custom_call.1} parent=15 // pred_region
          %s190 = sand.u32 %s74, 1
          %s191 = scalar_lea.sflag [#allocation6], %s190
          %s192 = sand.u32 %s74, 1
          %s193 = smul.addr %s192, 72
          %s194 = scalar_lea.vmem [#allocation5], %s193
          %s196 = ssub.s32 1152, 1152
          %197 = vsyncadd %s191, %s196
          %s198 = smul.addr %s29, 9
          %s199 = sadd.s32 %s30, %s198
          %s200 = smul.addr %s199, 128
          %s201 = scalar_lea.hbm %s1, %s200
          %s202 = sshll.u32 %s194, 4
          %s203 = int_to_ptr.vmem [resolvable:$true] %s202
          %208 = dma.hbm_to_vmem [thread:$0]  %s201, 1152, %s203, %s191, 128, 128, 8
        $region24: #{tpu_custom_call.1} parent=15 // pred_fallthru
          _
      $region16: #{tpu_custom_call.1} parent=5 // pred_fallthru
        _
      %p209 = scmp.le.s32.totalorder 1, %s22
      %p210 = scmp.lt.s32.totalorder %s22, 3
      %p211 = pnand %p209, %p210
      %p212 = pneg %p211
      // Predicated region
      $region25: #{tpu_custom_call.1} parent=5 // pred_check
        _
      $region26: #{tpu_custom_call.1} parent=5 // pred_check_branch
        %214 = sbr.rel (%p211) target = $region28
      $region27: #{tpu_custom_call.1} parent=5 // pred_region
        %s215 = ssub.s32 %s22, 1
        %s216 = sand.u32 %s49, 1
        %s217 = scalar_lea.sflag [#allocation3], %s216
        %s218 = sand.u32 %s49, 1
        %s219 = smul.addr %s218, 48
        %s220 = scalar_lea.vmem [#allocation2], %s219
        // Predicated region
        $region29: #{tpu_custom_call.1} parent=27 // pred_check
          %p221 = pneg %p62
        $region30: #{tpu_custom_call.1} parent=27 // pred_check_branch
          %223 = sbr.rel (%p221) target = $region32
        $region31: #{tpu_custom_call.1} parent=27 // pred_region
          %224 = dma.done %s217, 768
        $region32: #{tpu_custom_call.1} parent=27 // pred_fallthru
          _
        %s225 = sand.u32 %s77, 1
        %s226 = scalar_lea.sflag [#allocation6], %s225
        %s227 = sand.u32 %s77, 1
        %s228 = smul.addr %s227, 72
        %s229 = scalar_lea.vmem [#allocation5], %s228
        // Predicated region
        $region33: #{tpu_custom_call.1} parent=27 // pred_check
          %p230 = pneg %p90
        $region34: #{tpu_custom_call.1} parent=27 // pred_check_branch
          %232 = sbr.rel (%p230) target = $region36
        $region35: #{tpu_custom_call.1} parent=27 // pred_region
          %233 = dma.done %s226, 1152
        $region36: #{tpu_custom_call.1} parent=27 // pred_fallthru
          _
        %s234 = sand.u32 %s49, 1
        %s235 = scalar_lea.sflag [#allocation3], %s234
        %s236 = sand.u32 %s49, 1
        %s237 = smul.addr %s236, 48
        %s238 = scalar_lea.vmem [#allocation2], %s237
        %p239 = pneg %p62
        %p240 = pneg %p59
        %s241 = sand.u32 %s77, 1
        %s242 = scalar_lea.sflag [#allocation6], %s241
        %s243 = sand.u32 %s77, 1
        %s244 = smul.addr %s243, 72
        %s245 = scalar_lea.vmem [#allocation5], %s244
        %p246 = pneg %p90
        %p247 = pneg %p87
        %p248 = pneg %p118
        %p249 = pneg %p115
        %s250 = sand.u32 %s105, 1
        %s251 = scalar_lea.sflag [#allocation4], %s250
        %s252 = sand.u32 %s105, 1
        %s253 = smul.addr %s252, 24
        %s254 = scalar_lea.vmem [#allocation7], %s253
        %p255 = pneg %p146
        %p256 = pneg %p143
        %s257 = sand.u32 %s133, 1
        %s258 = scalar_lea.sflag [#allocation9], %s257
        %s259 = sand.u32 %s133, 1
        %s260 = smul.addr %s259, 40
        %s261 = scalar_lea.vmem [#allocation8], %s260
        %v262 = vld [vmem:[%s220] sm:$0xff]
        %s263 = sadd.s32 0, 8
        %s264 = scalar_lea.vmem %s220, %s263 [#allocation2]
        %v265 = vld [vmem:[%s264] sm:$0xff]
        %s266 = sadd.s32 0, 16
        %s267 = scalar_lea.vmem %s220, %s266 [#allocation2]
        %v268 = vld [vmem:[%s267] sm:$0xff]
        %s269 = sadd.s32 0, 24
        %s270 = scalar_lea.vmem %s220, %s269 [#allocation2]
        %v271 = vld [vmem:[%s270] sm:$0xff]
        %s272 = sadd.s32 0, 32
        %s273 = scalar_lea.vmem %s220, %s272 [#allocation2]
        %v274 = vld [vmem:[%s273] sm:$0xff]
        %s275 = sadd.s32 0, 40
        %s276 = scalar_lea.vmem %s220, %s275 [#allocation2]
        %v277 = vld [vmem:[%s276] sm:$0xff]
        %v278 = vmul.f32 %v265, %v277
        %v279 = vmul.f32 %v268, %v274
        %v280 = vsub.f32 %v278, %v279
        %v281 = vmul.f32 %v268, %v271
        %v282 = vmul.f32 %v262, %v277
        %v283 = vsub.f32 %v281, %v282
        %v284 = vmul.f32 %v262, %v274
        %v285 = vmul.f32 %v265, %v271
        %v286 = vsub.f32 %v284, %v285
        %v287 = vmul.f32 %v280, %v280
        %v288 = vmul.f32 %v283, %v283
        %v289 = vadd.f32 %v287, %v288
        %v290 = vmul.f32 %v286, %v286
        %v291 = vadd.f32 %v289, %v290
        %v292 = vmax.f32 %v291, 1e-24
        %v293 = vrsqrt.pop %v292
        %v294 = vmul.f32 %v292, 0.5
        %v295 = vmul.f32 %v294, %v293
        %v296 = vmul.f32 %v295, %v293
        %v297 = vsub.f32 1.5, %v296
        %v298 = vmul.f32 %v293, %v297
        %v299 = vmul.f32 %v280, %v298
        %v300 = vmul.f32 %v283, %v298
        %v301 = vmul.f32 %v286, %v298
        %v302 = vmul.f32 %v262, %v262
        %v303 = vmul.f32 %v265, %v265
        %v304 = vadd.f32 %v302, %v303
        %v305 = vmul.f32 %v268, %v268
        %v306 = vadd.f32 %v304, %v305
        %v307 = vmul.f32 %v262, %v271
        %v308 = vmul.f32 %v265, %v274
        %v309 = vadd.f32 %v307, %v308
        %v310 = vmul.f32 %v268, %v277
        %v311 = vadd.f32 %v309, %v310
        %v312 = vmul.f32 %v271, %v271
        %v313 = vmul.f32 %v274, %v274
        %v314 = vadd.f32 %v312, %v313
        %v315 = vmul.f32 %v277, %v277
        %v316 = vadd.f32 %v314, %v315
        %v317 = vmul.f32 %v306, %v316
        %v318 = vmul.f32 %v311, %v311
        %v319 = vsub.f32 %v317, %v318
        %v320 = vrcp.pop %v319
        %v321 = vmul.f32 %v319, %v320
        %v322 = vsub.f32 2.0, %v321
        %v323 = vmul.f32 %v320, %v322
        %v324 = vld [vmem:[%s229] sm:$0xff]
        %s325 = scalar_lea.vmem %s229, %s263 [#allocation5]
        %v326 = vld [vmem:[%s325] sm:$0xff]
        %s327 = scalar_lea.vmem %s229, %s266 [#allocation5]
        %v328 = vld [vmem:[%s327] sm:$0xff]
        %s329 = scalar_lea.vmem %s229, %s269 [#allocation5]
        %v330 = vld [vmem:[%s329] sm:$0xff]
        %s331 = scalar_lea.vmem %s229, %s272 [#allocation5]
        %v332 = vld [vmem:[%s331] sm:$0xff]
        %s333 = scalar_lea.vmem %s229, %s275 [#allocation5]
        %v334 = vld [vmem:[%s333] sm:$0xff]
        %s335 = sadd.s32 0, 48
        %s336 = scalar_lea.vmem %s229, %s335 [#allocation5]
        %v337 = vld [vmem:[%s336] sm:$0xff]
        %s338 = sadd.s32 0, 56
        %s339 = scalar_lea.vmem %s229, %s338 [#allocation5]
        %v340 = vld [vmem:[%s339] sm:$0xff]
        %s341 = sadd.s32 0, 64
        %s342 = scalar_lea.vmem %s229, %s341 [#allocation5]
        %v343 = vld [vmem:[%s342] sm:$0xff]
        %v344 = vmul.f32 %v324, %v316
        %v345 = vmul.f32 %v330, 2.0
        %v346 = vmul.f32 %v345, %v311
        %v347 = vsub.f32 %v344, %v346
        %v348 = vmul.f32 %v337, %v306
        %v349 = vadd.f32 %v347, %v348
        %v350 = vmul.f32 %v326, %v316
        %v351 = vmul.f32 %v332, 2.0
        %v352 = vmul.f32 %v351, %v311
        %v353 = vsub.f32 %v350, %v352
        %v354 = vmul.f32 %v340, %v306
        %v355 = vadd.f32 %v353, %v354
        %v356 = vmul.f32 %v328, %v316
        %v357 = vmul.f32 %v334, 2.0
        %v358 = vmul.f32 %v357, %v311
        %v359 = vsub.f32 %v356, %v358
        %v360 = vmul.f32 %v343, %v306
        %v361 = vadd.f32 %v359, %v360
        %v362 = vmul.f32 %v299, %v349
        %v363 = vmul.f32 %v300, %v355
        %v364 = vadd.f32 %v362, %v363
        %v365 = vmul.f32 %v301, %v361
        %v366 = vadd.f32 %v364, %v365
        %v367 = vmul.f32 %v366, -0.5
        %v368 = vmul.f32 %v367, %v323
        %v369 = vmul.f32 %v324, %v299
        %v370 = vmul.f32 %v326, %v300
        %v371 = vadd.f32 %v369, %v370
        %v372 = vmul.f32 %v328, %v301
        %v373 = vadd.f32 %v371, %v372
        %v374 = vmul.f32 %v330, %v299
        %v375 = vmul.f32 %v332, %v300
        %v376 = vadd.f32 %v374, %v375
        %v377 = vmul.f32 %v334, %v301
        %v378 = vadd.f32 %v376, %v377
        %v379 = vmul.f32 %v337, %v299
        %v380 = vmul.f32 %v340, %v300
        %v381 = vadd.f32 %v379, %v380
        %v382 = vmul.f32 %v343, %v301
        %v383 = vadd.f32 %v381, %v382
        %v384 = vmul.f32 %v373, %v383
        %v385 = vmul.f32 %v378, %v378
        %v386 = vsub.f32 %v384, %v385
        %v387 = vmul.f32 %v386, %v323
        %388 = vst [vmem:[%s254] sm:$0xff] %v299
        %s389 = scalar_lea.vmem %s254, %s263 [#allocation7]
        %390 = vst [vmem:[%s389] sm:$0xff] %v300
        %s391 = scalar_lea.vmem %s254, %s266 [#allocation7]
        %392 = vst [vmem:[%s391] sm:$0xff] %v301
        %393 = vst [vmem:[%s261] sm:$0xff] %v368
        %s394 = scalar_lea.vmem %s261, %s263 [#allocation8]
        %395 = vst [vmem:[%s394] sm:$0xff] %v387
        %s396 = scalar_lea.vmem %s261, %s266 [#allocation8]
        %397 = vst [vmem:[%s396] sm:$0xff] %v306
        %s398 = scalar_lea.vmem %s261, %s269 [#allocation8]
        %399 = vst [vmem:[%s398] sm:$0xff] %v311
        %s400 = scalar_lea.vmem %s261, %s272 [#allocation8]
        %401 = vst [vmem:[%s400] sm:$0xff] %v316
        %s402 = sand.u32 %s105, 1
        %s403 = scalar_lea.sflag [#allocation4], %s402
        %s404 = sand.u32 %s105, 1
        %s405 = smul.addr %s404, 24
        %s406 = scalar_lea.vmem [#allocation7], %s405
        %s407 = sand.u32 %s133, 1
        %s408 = scalar_lea.sflag [#allocation9], %s407
        %s409 = sand.u32 %s133, 1
        %s410 = smul.addr %s409, 40
        %s411 = scalar_lea.vmem [#allocation8], %s410
        // Predicated region
        $region37: #{tpu_custom_call.1} parent=27 // pred_check
          %p412 = pneg %p115
        $region38: #{tpu_custom_call.1} parent=27 // pred_check_branch
          %414 = sbr.rel (%p412) target = $region40
        $region39: #{tpu_custom_call.1} parent=27 // pred_region
          %s416 = ssub.s32 384, 384
          %417 = vsyncadd %s403, %s416
          %s418 = smul.addr %s31, 3
          %s419 = sadd.s32 %s32, %s418
          %s420 = smul.addr %s419, 128
          %s421 = scalar_lea.hbm %s2, %s420
          %s422 = sshll.u32 %s406, 4
          %s423 = int_to_ptr.vmem [resolvable:$true] %s422
          %428 = dma.vmem_to_hbm [thread:$0]  %s423, 384, %s421, %s403, 128, 128, 8
        $region40: #{tpu_custom_call.1} parent=27 // pred_fallthru
          _
        // Predicated region
        $region41: #{tpu_custom_call.1} parent=27 // pred_check
          %p429 = pneg %p143
        $region42: #{tpu_custom_call.1} parent=27 // pred_check_branch
          %431 = sbr.rel (%p429) target = $region44
        $region43: #{tpu_custom_call.1} parent=27 // pred_region
          %s433 = ssub.s32 640, 640
          %434 = vsyncadd %s408, %s433
          %s435 = smul.addr %s31, 5
          %s436 = sadd.s32 %s32, %s435
          %s437 = smul.addr %s436, 128
          %s438 = scalar_lea.hbm %s3, %s437
          %s439 = sshll.u32 %s411, 4
          %s440 = int_to_ptr.vmem [resolvable:$true] %s439
          %445 = dma.vmem_to_hbm [thread:$0]  %s440, 640, %s438, %s408, 128, 128, 8
        $region44: #{tpu_custom_call.1} parent=27 // pred_fallthru
          _
      $region28: #{tpu_custom_call.1} parent=5 // pred_fallthru
        _
      %p446 = scmp.le.s32.totalorder 2, %s22
      // Predicated region
      $region45: #{tpu_custom_call.1} parent=5 // pred_check
        %p447 = pneg %p446
      $region46: #{tpu_custom_call.1} parent=5 // pred_check_branch
        %449 = sbr.rel (%p447) target = $region48
      $region47: #{tpu_custom_call.1} parent=5 // pred_region
        %s450 = ssub.s32 %s22, 2
        // Predicated region
        $region49: #{tpu_custom_call.1} parent=47 // pred_check
          %p451 = pneg %p121
        $region50: #{tpu_custom_call.1} parent=47 // pred_check_branch
          %453 = sbr.rel (%p451) target = $region52
        $region51: #{tpu_custom_call.1} parent=47 // pred_region
          %s454 = sand.u32 %s106, 1
          %s455 = scalar_lea.sflag [#allocation4], %s454
          %s456 = sand.u32 %s106, 1
          %s457 = smul.addr %s456, 24
          %s458 = scalar_lea.vmem [#allocation7], %s457
          %459 = dma.done %s455, 384
        $region52: #{tpu_custom_call.1} parent=47 // pred_fallthru
          _
        // Predicated region
        $region53: #{tpu_custom_call.1} parent=47 // pred_check
          %p460 = pneg %p149
        $region54: #{tpu_custom_call.1} parent=47 // pred_check_branch
          %462 = sbr.rel (%p460) target = $region56
        $region55: #{tpu_custom_call.1} parent=47 // pred_region
          %s463 = sand.u32 %s134, 1
          %s464 = scalar_lea.sflag [#allocation9], %s463
          %s465 = sand.u32 %s134, 1
          %s466 = smul.addr %s465, 40
          %s467 = scalar_lea.vmem [#allocation8], %s466
          %468 = dma.done %s464, 640
        $region56: #{tpu_custom_call.1} parent=47 // pred_fallthru
          _
      $region48: #{tpu_custom_call.1} parent=5 // pred_fallthru
        _
    $region6: #{tpu_custom_call.1} parent=1 // loop_footer
      %s26 = sadd.s32 1, %s22
    $region7: #{tpu_custom_call.1} parent=1 // loop_footer_branch
      %21 = sbr.rel target = $region3
    $region8: #{tpu_custom_call.1} parent=1 // loop_exit
      _
    %469 = vsyncpa [#allocation3], 1
    %s470 = scalar_lea.sflag [#allocation3], 1
    %471 = vsyncpa %s470, 1
    %472 = vsyncpa [#allocation6], 1
    %s473 = scalar_lea.sflag [#allocation6], 1
    %474 = vsyncpa %s473, 1
    %475 = vsyncpa [#allocation4], 1
    %s476 = scalar_lea.sflag [#allocation4], 1
    %477 = vsyncpa %s476, 1
    %478 = vsyncpa [#allocation9], 1
    %s479 = scalar_lea.sflag [#allocation9], 1
    %480 = vsyncpa %s479, 1

</llo_original>
